<compile_context>
chip_gen: v6e
topology: v6e:2x2x1
jax: 0.10.0
libtpu: 0.0.40
codegen_flags: <defaults>
</compile_context>

<pallas_src>
import jax
import jax.numpy as jnp
from jax.experimental import pallas as pl
from jax.experimental.pallas import tpu as pltpu


def _blur_select_kernel(sel_ref, im_ref, bv_ref, bht_ref, out_ref):
    # sel_ref : SMEM (B,)  int32       -- per-batch apply mask
    # im_ref  : VMEM (1, C, H, W)      -- original image block for batch b
    # bv_ref  : VMEM (1, H, H)  f32    -- vertical band matrix   [h_out, h_in]
    # bht_ref : VMEM (1, W, W)  f32    -- horizontal band matrix [w_in, w_out]
    # out_ref : VMEM (1, C, H, W)
    b = pl.program_id(0)
    C, H, W = out_ref.shape[1], out_ref.shape[2], out_ref.shape[3]

    apply_blur = sel_ref[b] != 0          # single SMEM read, hoisted

    @pl.when(apply_blur)
    def _blur():
        x = im_ref[0].astype(jnp.float32)                     # (C, H, W), one cast
        bht = bht_ref[0]                                      # (W_in, W_out) f32
        bv = bv_ref[0]                                        # (H_out, H_in) f32

        # Horizontal pass on the MXU: reflect pad + taps are inside bht, so a
        # single (C*H, W) @ (W, W) matmul blurs every row of every channel.
        t1 = jnp.dot(x.reshape(C * H, W), bht,
                     preferred_element_type=jnp.float32).reshape(C, H, W)

        # Vertical pass on the MXU: per-channel (H, H) @ (H, W) matmuls
        # (C is a small compile-time constant; no in-kernel transposes needed).
        for c in range(C):
            out_c = jnp.dot(bv, t1[c], preferred_element_type=jnp.float32)
            out_ref[0, c] = out_c.astype(out_ref.dtype)

    @pl.when(jnp.logical_not(apply_blur))
    def _passthrough():
        out_ref[...] = im_ref[...]                            # straight block copy


def _gaussian_kernel1d(kernel_size, sigma, dtype):
    # sigma: (B,) -> (B, K), each row sums to 1 (matches get_gaussian_kernel1d).
    K = kernel_size
    half = (K - 1) * 0.5
    x = jnp.linspace(-half, half, K).astype(dtype)
    pdf = jnp.exp(-0.5 * (x[None, :] / sigma[:, None].astype(dtype)) ** 2)
    return pdf / jnp.sum(pdf, axis=1, keepdims=True)          # (B, K)


def _reflect_index(idx, n):
    # torch / numpy 'reflect' (edge not repeated); valid while kernel radius < n.
    idx = jnp.abs(idx)
    return jnp.where(idx >= n, 2 * (n - 1) - idx, idx)


def _blur_band_matrix(k1d, n, pad):
    """(B, n, n) matrix M with M[b, dst, src] = sum_i k1d[b,i]*[src == reflect(dst+i-pad)].

    Left-multiplying a plane by M applies the 1-D gaussian along that axis with
    reflect boundary handling — padding is folded into the matrix, so the Pallas
    kernel never materializes a padded tensor.
    """
    B, K = k1d.shape
    dst = jnp.arange(n)
    src_axis = jnp.arange(n)
    m = jnp.zeros((B, n, n), k1d.dtype)
    for i in range(K):
        src = _reflect_index(dst + i - pad, n)                            # (n,)
        onehot = (src[:, None] == src_axis[None, :]).astype(k1d.dtype)    # (dst, src)
        m = m + k1d[:, i][:, None, None] * onehot[None]
    return m


def random_gaussian_pallas(im, sel, sigma, kernel_size):
    """im: (B, C, H, W); sel: (B,) bool; sigma: (B,) float."""
    B, C, H, W = im.shape
    K = kernel_size
    pad = K // 2
    assert pad < H and pad < W, "reflect padding requires kernel radius < spatial size"

    k1d = _gaussian_kernel1d(K, sigma, jnp.float32)                       # (B, K)
    bv = _blur_band_matrix(k1d, H, pad)                                   # (B, H, H)  [h_out, h_in]
    bht = jnp.swapaxes(_blur_band_matrix(k1d, W, pad), 1, 2)              # (B, W, W)  [w_in, w_out]
    sel_i32 = sel.astype(jnp.int32)

    # Explicit VMEM budget: double-buffered in/out blocks + band matrices + f32 temps.
    itemsize = jnp.dtype(im.dtype).itemsize
    blk_bytes = C * H * W * itemsize
    band_bytes = (H * H + W * W) * 4
    f32_tmp_bytes = 3 * C * H * W * 4
    need = 2 * (2 * blk_bytes + band_bytes) + f32_tmp_bytes
    vmem_limit = int(min(max(4 * need, 4 << 20), 32 << 20))

    return pl.pallas_call(
        _blur_select_kernel,
        out_shape=jax.ShapeDtypeStruct((B, C, H, W), im.dtype),
        grid=(B,),
        in_specs=[
            pl.BlockSpec(memory_space=pltpu.SMEM),                        # sel (B,)
            pl.BlockSpec((1, C, H, W), lambda b: (b, 0, 0, 0)),           # im
            pl.BlockSpec((1, H, H), lambda b: (b, 0, 0)),                 # bv
            pl.BlockSpec((1, W, W), lambda b: (b, 0, 0)),                 # bht
        ],
        out_specs=pl.BlockSpec((1, C, H, W), lambda b: (b, 0, 0, 0)),
        compiler_params=pltpu.CompilerParams(
            dimension_semantics=("parallel",),
            vmem_limit_bytes=vmem_limit),
    )(sel_i32, im, bv, bht)


def _reference(im, sel, sigma, kernel_size):
    # Pure-JAX reference mirroring the PyTorch forward semantics (full K^2 conv).
    B, C, H, W = im.shape
    K = kernel_size
    pad = K // 2
    k1d = _gaussian_kernel1d(K, sigma, im.dtype)                          # (B, K)
    ker2d = k1d[:, :, None] * k1d[:, None, :]                             # (B, Ky, Kx)
    padded = jnp.pad(im, ((0, 0), (0, 0), (pad, pad), (pad, pad)), mode="reflect")
    acc = jnp.zeros_like(im)
    for i in range(K):
        for j in range(K):
            acc = acc + ker2d[:, i, j][:, None, None, None] * padded[:, :, i:i + H, j:j + W]
    return jnp.where(sel[:, None, None, None], acc, im)


if __name__ == "__main__":
    # Module config: size=50 -> kernel_size = int(0.1*50) = 5 (already odd)
    size = 50
    kernel_size = int(0.1 * size)
    if kernel_size % 2 == 0:
        kernel_size += 1
    sigma_range = (0.1, 2.0)

    B, C, H, W = 2, 4, 16, 16
    key = jax.random.PRNGKey(0)
    k_im, k_sigma = jax.random.split(key, 2)

    im = jax.random.normal(k_im, (B, C, H, W), dtype=jnp.float32)
    # TODO(synk): torch.rand / uniform_ draws from forward() are taken as explicit
    # deterministic inputs; one selected and one pass-through batch so both
    # pl.when branches execute.
    sel = jnp.array([True, False])                                            # (B,) bool
    sigma = jax.random.uniform(k_sigma, (B,), minval=sigma_range[0],
                               maxval=sigma_range[1]).astype(jnp.float32)     # (B,)

    out = random_gaussian_pallas(im, sel, sigma, kernel_size)
    out = jax.block_until_ready(out)

    ref = _reference(im, sel, sigma, kernel_size)
    assert out.shape == im.shape and out.dtype == im.dtype
    # MXU f32 accumulation order differs from the reference's VPU tap-sum.
    assert jnp.allclose(out, ref, atol=1e-3, rtol=1e-3), "mismatch vs reference"

    print("KERNEL_OK")
</pallas_src>

<mosaic_0001>
module attributes {stable_mosaic.version = 11 : i64} {
  func.func @_blur_select_kernel(%arg0: i32, %arg1: memref<2xi32, #tpu.memory_space<smem>>, %arg2: memref<1x4x16x16xf32, #tpu.memory_space<vmem>>, %arg3: memref<1x16x16xf32, #tpu.memory_space<vmem>>, %arg4: memref<1x16x16xf32, #tpu.memory_space<vmem>>, %arg5: memref<1x4x16x16xf32, #tpu.memory_space<vmem>>) attributes {dimension_semantics = [#tpu.dimension_semantics<parallel>], iteration_bounds = array<i64: 2>, scalar_prefetch = 0 : i64, scratch_operands = 0 : i64, tpu.core_type = #tpu.core_type<tc>, window_params = [{transform_indices = @transform_0, window_bounds = array<i64: 2>}, {transform_indices = @transform_1, window_bounds = array<i64: 1, 4, 16, 16>}, {transform_indices = @transform_2, window_bounds = array<i64: 1, 16, 16>}, {transform_indices = @transform_3, window_bounds = array<i64: 1, 16, 16>}, {transform_indices = @transform_4, window_bounds = array<i64: 1, 4, 16, 16>}]} {
    %0 = arith.index_cast %arg0 : i32 to index
    %1 = memref.load %arg1[%0] : memref<2xi32, #tpu.memory_space<smem>>
    %c0_i32 = arith.constant 0 : i32
    %2 = arith.cmpi ne, %1, %c0_i32 : i32
    %3 = arith.extui %2 : i1 to i32
    %c0_i32_0 = arith.constant 0 : i32
    %4 = arith.cmpi ne, %3, %c0_i32_0 : i32
    scf.if %4 {
      %c0 = arith.constant 0 : index
      %c0_2 = arith.constant 0 : index
      %c0_3 = arith.constant 0 : index
      %c0_4 = arith.constant 0 : index
      %8 = vector.load %arg2[%c0, %c0_2, %c0_3, %c0_4] : memref<1x4x16x16xf32, #tpu.memory_space<vmem>>, vector<1x4x16x16xf32>
      %9 = vector.shape_cast %8 : vector<1x4x16x16xf32> to vector<4x16x16xf32>
      %c0_5 = arith.constant 0 : index
      %c0_6 = arith.constant 0 : index
      %c0_7 = arith.constant 0 : index
      %10 = vector.load %arg4[%c0_5, %c0_6, %c0_7] : memref<1x16x16xf32, #tpu.memory_space<vmem>>, vector<1x16x16xf32>
      %11 = vector.shape_cast %10 : vector<1x16x16xf32> to vector<16x16xf32>
      %c0_8 = arith.constant 0 : index
      %c0_9 = arith.constant 0 : index
      %c0_10 = arith.constant 0 : index
      %12 = vector.load %arg3[%c0_8, %c0_9, %c0_10] : memref<1x16x16xf32, #tpu.memory_space<vmem>>, vector<1x16x16xf32>
      %13 = vector.shape_cast %12 : vector<1x16x16xf32> to vector<16x16xf32>
      %14 = vector.shape_cast %9 : vector<4x16x16xf32> to vector<64x16xf32>
      %cst = arith.constant dense<0.000000e+00> : vector<64x16xf32>
      %15 = tpu.matmul %14, %11, %cst {dimension_numbers = #tpu.dot_dimension_numbers<[1], [0], [0], [1], [0, 0, 1, 1], [], []>} : vector<64x16xf32>, vector<16x16xf32>, vector<64x16xf32> -> vector<64x16xf32>
      %16 = vector.shape_cast %15 : vector<64x16xf32> to vector<4x16x16xf32>
      %17 = vector.extract_strided_slice %16 {offsets = [0, 0, 0], sizes = [1, 16, 16], strides = [1, 1, 1]} : vector<4x16x16xf32> to vector<1x16x16xf32>
      %18 = vector.shape_cast %17 : vector<1x16x16xf32> to vector<16x16xf32>
      %cst_11 = arith.constant dense<0.000000e+00> : vector<16x16xf32>
      %19 = tpu.matmul %13, %18, %cst_11 {dimension_numbers = #tpu.dot_dimension_numbers<[1], [0], [0], [1], [0, 0, 1, 1], [], []>} : vector<16x16xf32>, vector<16x16xf32>, vector<16x16xf32> -> vector<16x16xf32>
      %c0_12 = arith.constant 0 : index
      %c0_13 = arith.constant 0 : index
      %c0_14 = arith.constant 0 : index
      %c0_15 = arith.constant 0 : index
      %20 = vector.load %arg5[%c0_12, %c0_13, %c0_14, %c0_15] : memref<1x4x16x16xf32, #tpu.memory_space<vmem>>, vector<1x1x16x16xf32>
      %21 = vector.shape_cast %20 : vector<1x1x16x16xf32> to vector<16x16xf32>
      %22 = vector.shape_cast %19 : vector<16x16xf32> to vector<1x1x16x16xf32>
      tpu.vector_store %arg5[%c0_12, %c0_13, %c0_14, %c0_15], %22 {strides = array<i32>} : memref<1x4x16x16xf32, #tpu.memory_space<vmem>>, vector<1x1x16x16xf32>,
      %23 = vector.extract_strided_slice %16 {offsets = [1, 0, 0], sizes = [1, 16, 16], strides = [1, 1, 1]} : vector<4x16x16xf32> to vector<1x16x16xf32>
      %24 = vector.shape_cast %23 : vector<1x16x16xf32> to vector<16x16xf32>
      %cst_16 = arith.constant dense<0.000000e+00> : vector<16x16xf32>
      %25 = tpu.matmul %13, %24, %cst_16 {dimension_numbers = #tpu.dot_dimension_numbers<[1], [0], [0], [1], [0, 0, 1, 1], [], []>} : vector<16x16xf32>, vector<16x16xf32>, vector<16x16xf32> -> vector<16x16xf32>
      %c0_17 = arith.constant 0 : index
      %c1 = arith.constant 1 : index
      %c0_18 = arith.constant 0 : index
      %c0_19 = arith.constant 0 : index
      %26 = vector.load %arg5[%c0_17, %c1, %c0_18, %c0_19] : memref<1x4x16x16xf32, #tpu.memory_space<vmem>>, vector<1x1x16x16xf32>
      %27 = vector.shape_cast %26 : vector<1x1x16x16xf32> to vector<16x16xf32>
      %28 = vector.shape_cast %25 : vector<16x16xf32> to vector<1x1x16x16xf32>
      tpu.vector_store %arg5[%c0_17, %c1, %c0_18, %c0_19], %28 {strides = array<i32>} : memref<1x4x16x16xf32, #tpu.memory_space<vmem>>, vector<1x1x16x16xf32>,
      %29 = vector.extract_strided_slice %16 {offsets = [2, 0, 0], sizes = [1, 16, 16], strides = [1, 1, 1]} : vector<4x16x16xf32> to vector<1x16x16xf32>
      %30 = vector.shape_cast %29 : vector<1x16x16xf32> to vector<16x16xf32>
      %cst_20 = arith.constant dense<0.000000e+00> : vector<16x16xf32>
      %31 = tpu.matmul %13, %30, %cst_20 {dimension_numbers = #tpu.dot_dimension_numbers<[1], [0], [0], [1], [0, 0, 1, 1], [], []>} : vector<16x16xf32>, vector<16x16xf32>, vector<16x16xf32> -> vector<16x16xf32>
      %c0_21 = arith.constant 0 : index
      %c2 = arith.constant 2 : index
      %c0_22 = arith.constant 0 : index
      %c0_23 = arith.constant 0 : index
      %32 = vector.load %arg5[%c0_21, %c2, %c0_22, %c0_23] : memref<1x4x16x16xf32, #tpu.memory_space<vmem>>, vector<1x1x16x16xf32>
      %33 = vector.shape_cast %32 : vector<1x1x16x16xf32> to vector<16x16xf32>
      %34 = vector.shape_cast %31 : vector<16x16xf32> to vector<1x1x16x16xf32>
      tpu.vector_store %arg5[%c0_21, %c2, %c0_22, %c0_23], %34 {strides = array<i32>} : memref<1x4x16x16xf32, #tpu.memory_space<vmem>>, vector<1x1x16x16xf32>,
      %35 = vector.extract_strided_slice %16 {offsets = [3, 0, 0], sizes = [1, 16, 16], strides = [1, 1, 1]} : vector<4x16x16xf32> to vector<1x16x16xf32>
      %36 = vector.shape_cast %35 : vector<1x16x16xf32> to vector<16x16xf32>
      %cst_24 = arith.constant dense<0.000000e+00> : vector<16x16xf32>
      %37 = tpu.matmul %13, %36, %cst_24 {dimension_numbers = #tpu.dot_dimension_numbers<[1], [0], [0], [1], [0, 0, 1, 1], [], []>} : vector<16x16xf32>, vector<16x16xf32>, vector<16x16xf32> -> vector<16x16xf32>
      %c0_25 = arith.constant 0 : index
      %c3 = arith.constant 3 : index
      %c0_26 = arith.constant 0 : index
      %c0_27 = arith.constant 0 : index
      %38 = vector.load %arg5[%c0_25, %c3, %c0_26, %c0_27] : memref<1x4x16x16xf32, #tpu.memory_space<vmem>>, vector<1x1x16x16xf32>
      %39 = vector.shape_cast %38 : vector<1x1x16x16xf32> to vector<16x16xf32>
      %40 = vector.shape_cast %37 : vector<16x16xf32> to vector<1x1x16x16xf32>
      tpu.vector_store %arg5[%c0_25, %c3, %c0_26, %c0_27], %40 {strides = array<i32>} : memref<1x4x16x16xf32, #tpu.memory_space<vmem>>, vector<1x1x16x16xf32>,
    } else {
    }
    %true = arith.constant true
    %5 = arith.xori %2, %true : i1
    %6 = arith.extui %5 : i1 to i32
    %c0_i32_1 = arith.constant 0 : i32
    %7 = arith.cmpi ne, %6, %c0_i32_1 : i32
    scf.if %7 {
      %c0 = arith.constant 0 : index
      %c0_2 = arith.constant 0 : index
      %c0_3 = arith.constant 0 : index
      %c0_4 = arith.constant 0 : index
      %8 = vector.load %arg2[%c0, %c0_2, %c0_3, %c0_4] : memref<1x4x16x16xf32, #tpu.memory_space<vmem>>, vector<1x4x16x16xf32>
      %c0_5 = arith.constant 0 : index
      %c0_6 = arith.constant 0 : index
      %c0_7 = arith.constant 0 : index
      %c0_8 = arith.constant 0 : index
      %9 = vector.load %arg5[%c0_5, %c0_6, %c0_7, %c0_8] : memref<1x4x16x16xf32, #tpu.memory_space<vmem>>, vector<1x4x16x16xf32>
      tpu.vector_store %arg5[%c0_5, %c0_6, %c0_7, %c0_8], %8 {strides = array<i32>} : memref<1x4x16x16xf32, #tpu.memory_space<vmem>>, vector<1x4x16x16xf32>,
    } else {
    }
    return
  }
  func.func @transform_0(%arg0: i32) -> i32 {
    %c0_i32 = arith.constant 0 : i32
    %c0_i32_0 = arith.constant 0 : i32
    return %c0_i32 : i32
  }
  func.func @transform_1(%arg0: i32) -> (i32, i32, i32, i32) {
    %c0_i32 = arith.constant 0 : i32
    %c0_i32_0 = arith.constant 0 : i32
    %c0_i32_1 = arith.constant 0 : i32
    %c0_i32_2 = arith.constant 0 : i32
    return %arg0, %c0_i32, %c0_i32_0, %c0_i32_1 : i32, i32, i32, i32
  }
  func.func @transform_2(%arg0: i32) -> (i32, i32, i32) {
    %c0_i32 = arith.constant 0 : i32
    %c0_i32_0 = arith.constant 0 : i32
    %c0_i32_1 = arith.constant 0 : i32
    return %arg0, %c0_i32, %c0_i32_0 : i32, i32, i32
  }
  func.func @transform_3(%arg0: i32) -> (i32, i32, i32) {
    %c0_i32 = arith.constant 0 : i32
    %c0_i32_0 = arith.constant 0 : i32
    %c0_i32_1 = arith.constant 0 : i32
    return %arg0, %c0_i32, %c0_i32_0 : i32, i32, i32
  }
  func.func @transform_4(%arg0: i32) -> (i32, i32, i32, i32) {
    %c0_i32 = arith.constant 0 : i32
    %c0_i32_0 = arith.constant 0 : i32
    %c0_i32_1 = arith.constant 0 : i32
    %c0_i32_2 = arith.constant 0 : i32
    return %arg0, %c0_i32, %c0_i32_0, %c0_i32_1 : i32, i32, i32, i32
  }
}

</mosaic_0001>

<llo_original>
// kernel: tpu_custom_call.1
$region0: #{tpu_custom_call.1}
  #allocation0 [shape = 'u32[]', space=smem, size = 0x4, offset = 0x4, fixed_abs, tag = 'smem constant byte address 0x4 - core index']
  #allocation1 [shape = 'u32[144,128]{1,0:T(1,128)}', space=vmem, size = 0x12000, scoped, tag = 'internal scratch']
  %s0 = inlined_call_operand.hbm [shape: s32[2], index: 0, kind: input, shape index: {}]
  %s1 = inlined_call_operand.hbm [shape: f32[2,4,16,16], index: 1, kind: input, shape index: {}]
  %s2 = inlined_call_operand.hbm [shape: f32[2,16,16], index: 2, kind: input, shape index: {}]
  %s3 = inlined_call_operand.hbm [shape: f32[2,16,16], index: 3, kind: input, shape index: {}]
  %s4 = inlined_call_operand.hbm [shape: f32[2,4,16,16], index: 4, kind: output, shape index: {}]
  %s5 = sld [smem:[#allocation0]]
  $region73: #{tpu_custom_call.1} parent=0
    _
  %s7 = ssub.s32 1, %s5
  %s8 = scalar_select 0, %s7, %s5
  $region1: #{tpu_custom_call.1} parent=0
    #allocation2 [shape = 'u8[512]{0}', space=smem, size = 0x200, scoped, tag = 'input window, operand 0, single buffered']
    #allocation3 [shape = 's32[2]{0}', space=sflag, size = 0x8, scoped, tag = 'scoped memory for tpu_custom_call.1']
    #allocation4 [shape = 's32[2]{0}', space=sflag, size = 0x8, scoped, tag = 'scoped memory for tpu_custom_call.1']
    #allocation5 [shape = 's32[2]{0}', space=sflag, size = 0x8, scoped, tag = 'scoped memory for tpu_custom_call.1']
    #allocation6 [shape = 'u8[65536]{0}', space=vmem, size = 0x10000, scoped, tag = 'input window, operand 1']
    #allocation7 [shape = 'u8[16384]{0}', space=vmem, size = 0x4000, scoped, tag = 'input window, operand 2']
    #allocation8 [shape = 's32[2]{0}', space=sflag, size = 0x8, scoped, tag = 'scoped memory for tpu_custom_call.1']
    #allocation9 [shape = 'u8[16384]{0}', space=vmem, size = 0x4000, scoped, tag = 'input window, operand 3']
    #allocation10 [shape = 'u8[65536]{0}', space=vmem, size = 0x10000, scoped, tag = 'output window, operand 0']
    %9 = vsyncpa [#allocation5], 0
    %10 = vsyncpa [#allocation3], 0
    %s11 = scalar_lea.sflag [#allocation3], 1
    %12 = vsyncpa %s11, 0
    %13 = vsyncpa [#allocation8], 0
    %s14 = scalar_lea.sflag [#allocation8], 1
    %15 = vsyncpa %s14, 0
    %16 = vsyncpa [#allocation4], 0
    %s17 = scalar_lea.sflag [#allocation4], 1
    %18 = vsyncpa %s17, 0
    loop: start=0, step=1, limit=4
    $region2: #{tpu_custom_call.1} parent=1 // loop_pre_header
      _
    $region3: #{tpu_custom_call.1} parent=1 // loop_header
      %s20 = sphi 0, %s24
      %p21 = scmp.ge.s32.totalorder %s20, 4
      %s28 = sphi 0, %s28
      %s30 = sphi 0, %s28
      %s31 = sphi 0, %s30
      %s45 = sphi 0, %s31
      %s51 = sphi 0, %s53
      %s54 = sphi 0, %s51
      %s55 = sphi 0, %s54
      %s71 = sphi 0, %s55
      %s77 = sphi 0, %s79
      %s80 = sphi 0, %s77
      %s81 = sphi 0, %s80
      %s97 = sphi 0, %s81
      %s103 = sphi 0, %s105
      %s106 = sphi 0, %s103
      %s107 = sphi 0, %s106
      %s123 = sphi 0, %s107
      %s129 = sphi 0, %s131
      %s132 = sphi 0, %s129
      %s133 = sphi 0, %s132
      %s149 = sphi 0, %s133
    $region4: #{tpu_custom_call.1} parent=1 // loop_header_branch
      %23 = sbr.rel (%p21) target = $region8
    $region5: #{tpu_custom_call.1} parent=1 // loop_body
      %s25 = ssub.s32 %s20, 1
      %s26 = ssub.s32 %s20, 2
      %s27 = sadd.s32 %s20, 1
      %s29 = sadd.s32 %s28, 1
      %p32 = scmp.eq.s32.totalorder %s20, 1
      %p33 = scmp.ne.s32.totalorder %s28, %s30
      %p34 = scmp.eq.s32.totalorder %s20, 0
      %p35 = por %p33, %p34
      %p36 = scmp.ne.s32.totalorder %s28, %s30
      %p37 = scmp.eq.s32.totalorder %s25, 1
      %p38 = por %p36, %p37
      %p39 = scmp.ne.s32.totalorder %s30, %s31
      %p40 = scmp.eq.s32.totalorder %s25, 0
      %p41 = por %p39, %p40
      %p42 = scmp.ne.s32.totalorder %s30, %s31
      %p43 = scmp.eq.s32.totalorder %s26, 1
      %p44 = por %p42, %p43
      %p46 = scmp.ne.s32.totalorder %s31, %s45
      %p47 = scmp.eq.s32.totalorder %s26, 0
      %p48 = por %p46, %p47
      %s49 = ssub.s32 %s20, %s27
      %p50 = scmp.eq.s32.totalorder %s49, 0
      %s52 = sadd.s32 %s51, 1
      %s53 = scalar_select %p50, %s51, %s52
      %p56 = pneg %p50
      %p57 = scmp.eq.s32.totalorder %s20, 1
      %p58 = por %p56, %p57
      %p59 = scmp.ne.s32.totalorder %s51, %s54
      %p60 = scmp.eq.s32.totalorder %s20, 0
      %p61 = por %p59, %p60
      %p62 = scmp.ne.s32.totalorder %s51, %s54
      %p63 = scmp.eq.s32.totalorder %s25, 1
      %p64 = por %p62, %p63
      %p65 = scmp.ne.s32.totalorder %s54, %s55
      %p66 = scmp.eq.s32.totalorder %s25, 0
      %p67 = por %p65, %p66
      %p68 = scmp.ne.s32.totalorder %s54, %s55
      %p69 = scmp.eq.s32.totalorder %s26, 1
      %p70 = por %p68, %p69
      %p72 = scmp.ne.s32.totalorder %s55, %s71
      %p73 = scmp.eq.s32.totalorder %s26, 0
      %p74 = por %p72, %p73
      %s75 = ssub.s32 %s20, %s27
      %p76 = scmp.eq.s32.totalorder %s75, 0
      %s78 = sadd.s32 %s77, 1
      %s79 = scalar_select %p76, %s77, %s78
      %p82 = pneg %p76
      %p83 = scmp.eq.s32.totalorder %s20, 1
      %p84 = por %p82, %p83
      %p85 = scmp.ne.s32.totalorder %s77, %s80
      %p86 = scmp.eq.s32.totalorder %s20, 0
      %p87 = por %p85, %p86
      %p88 = scmp.ne.s32.totalorder %s77, %s80
      %p89 = scmp.eq.s32.totalorder %s25, 1
      %p90 = por %p88, %p89
      %p91 = scmp.ne.s32.totalorder %s80, %s81
      %p92 = scmp.eq.s32.totalorder %s25, 0
      %p93 = por %p91, %p92
      %p94 = scmp.ne.s32.totalorder %s80, %s81
      %p95 = scmp.eq.s32.totalorder %s26, 1
      %p96 = por %p94, %p95
      %p98 = scmp.ne.s32.totalorder %s81, %s97
      %p99 = scmp.eq.s32.totalorder %s26, 0
      %p100 = por %p98, %p99
      %s101 = ssub.s32 %s20, %s27
      %p102 = scmp.eq.s32.totalorder %s101, 0
      %s104 = sadd.s32 %s103, 1
      %s105 = scalar_select %p102, %s103, %s104
      %p108 = pneg %p102
      %p109 = scmp.eq.s32.totalorder %s20, 1
      %p110 = por %p108, %p109
      %p111 = scmp.ne.s32.totalorder %s103, %s106
      %p112 = scmp.eq.s32.totalorder %s20, 0
      %p113 = por %p111, %p112
      %p114 = scmp.ne.s32.totalorder %s103, %s106
      %p115 = scmp.eq.s32.totalorder %s25, 1
      %p116 = por %p114, %p115
      %p117 = scmp.ne.s32.totalorder %s106, %s107
      %p118 = scmp.eq.s32.totalorder %s25, 0
      %p119 = por %p117, %p118
      %p120 = scmp.ne.s32.totalorder %s106, %s107
      %p121 = scmp.eq.s32.totalorder %s26, 1
      %p122 = por %p120, %p121
      %p124 = scmp.ne.s32.totalorder %s107, %s123
      %p125 = scmp.eq.s32.totalorder %s26, 0
      %p126 = por %p124, %p125
      %s127 = ssub.s32 %s20, %s27
      %p128 = scmp.eq.s32.totalorder %s127, 0
      %s130 = sadd.s32 %s129, 1
      %s131 = scalar_select %p128, %s129, %s130
      %p134 = pneg %p128
      %p135 = scmp.eq.s32.totalorder %s20, 1
      %p136 = por %p134, %p135
      %p137 = scmp.ne.s32.totalorder %s129, %s132
      %p138 = scmp.eq.s32.totalorder %s20, 0
      %p139 = por %p137, %p138
      %p140 = scmp.ne.s32.totalorder %s129, %s132
      %p141 = scmp.eq.s32.totalorder %s25, 1
      %p142 = por %p140, %p141
      %p143 = scmp.ne.s32.totalorder %s132, %s133
      %p144 = scmp.eq.s32.totalorder %s25, 0
      %p145 = por %p143, %p144
      %p146 = scmp.ne.s32.totalorder %s132, %s133
      %p147 = scmp.eq.s32.totalorder %s26, 1
      %p148 = por %p146, %p147
      %p150 = scmp.ne.s32.totalorder %s133, %s149
      %p151 = scmp.eq.s32.totalorder %s26, 0
      %p152 = por %p150, %p151
      %p153 = scmp.le.s32.totalorder 1, %s20
      %p154 = scmp.lt.s32.totalorder %s20, 3
      %p155 = pnand %p153, %p154
      %p156 = pneg %p155
      // Predicated region
      $region9: #{tpu_custom_call.1} parent=5 // pred_check
        _
      $region10: #{tpu_custom_call.1} parent=5 // pred_check_branch
        %158 = sbr.rel (%p155) target = $region12
      $region11: #{tpu_custom_call.1} parent=5 // pred_region
        %s159 = ssub.s32 %s20, 1
        // Predicated region
        $region13: #{tpu_custom_call.1} parent=11 // pred_check
          %p160 = pneg %p41
        $region14: #{tpu_custom_call.1} parent=11 // pred_check_branch
          %162 = sbr.rel (%p160) target = $region16
        $region15: #{tpu_custom_call.1} parent=11 // pred_region
          %s164 = ssub.s32 16, 16
          %165 = vsyncadd [#allocation5], %s164
          %168 = dma.hbm_to_smem %s0, 16, [#allocation2], [#allocation5]
        $region16: #{tpu_custom_call.1} parent=11 // pred_fallthru
          _
      $region12: #{tpu_custom_call.1} parent=5 // pred_fallthru
        _
      %p169 = scmp.lt.s32.totalorder %s20, 2
      // Predicated region
      $region17: #{tpu_custom_call.1} parent=5 // pred_check
        %p170 = pneg %p169
      $region18: #{tpu_custom_call.1} parent=5 // pred_check_branch
        %172 = sbr.rel (%p170) target = $region20
      $region19: #{tpu_custom_call.1} parent=5 // pred_region
        // Predicated region
        $region21: #{tpu_custom_call.1} parent=19 // pred_check
          %p173 = pneg %p61
        $region22: #{tpu_custom_call.1} parent=19 // pred_check_branch
          %175 = sbr.rel (%p173) target = $region24
        $region23: #{tpu_custom_call.1} parent=19 // pred_region
          %s176 = sand.u32 %s51, 1
          %s177 = scalar_lea.sflag [#allocation3], %s176
          %s178 = sand.u32 %s51, 1
          %s179 = smul.addr %s178, 64
          %s180 = scalar_lea.vmem [#allocation6], %s179
          %s182 = ssub.s32 1024, 1024
          %183 = vsyncadd %s177, %s182
          %s184 = smul.addr %s20, 8
          %s185 = smul.addr %s184, 128
          %s186 = scalar_lea.hbm %s1, %s185
          %s187 = sshll.u32 %s180, 4
          %s188 = int_to_ptr.vmem [resolvable:$true] %s187
          %193 = dma.hbm_to_vmem [thread:$0]  %s186, 1024, %s188, %s177, 128, 128, 8
        $region24: #{tpu_custom_call.1} parent=19 // pred_fallthru
          _
        // Predicated region
        $region25: #{tpu_custom_call.1} parent=19 // pred_check
          %p194 = pneg %p87
        $region26: #{tpu_custom_call.1} parent=19 // pred_check_branch
          %196 = sbr.rel (%p194) target = $region28
        $region27: #{tpu_custom_call.1} parent=19 // pred_region
          %s197 = sand.u32 %s20, 1
          %s198 = scalar_lea.sflag [#allocation8], %s197
          %s199 = sand.u32 %s77, 1
          %s200 = smul.addr %s199, 16
          %s201 = scalar_lea.vmem [#allocation7], %s200
          %s203 = ssub.s32 256, 256
          %204 = vsyncadd %s198, %s203
          %s205 = smul.addr %s20, 2
          %s206 = smul.addr %s205, 128
          %s207 = scalar_lea.hbm %s2, %s206
          %s208 = sshll.u32 %s201, 4
          %s209 = int_to_ptr.vmem [resolvable:$true] %s208
          %214 = dma.hbm_to_vmem [thread:$0]  %s207, 256, %s209, %s198, 128, 128, 8
        $region28: #{tpu_custom_call.1} parent=19 // pred_fallthru
          _
        // Predicated region
        $region29: #{tpu_custom_call.1} parent=19 // pred_check
          %p215 = pneg %p113
        $region30: #{tpu_custom_call.1} parent=19 // pred_check_branch
          %217 = sbr.rel (%p215) target = $region32
        $region31: #{tpu_custom_call.1} parent=19 // pred_region
          %s218 = sand.u32 %s20, 1
          %s219 = scalar_lea.sflag [#allocation8], %s218
          %s220 = sand.u32 %s103, 1
          %s221 = smul.addr %s220, 16
          %s222 = scalar_lea.vmem [#allocation9], %s221
          %s224 = ssub.s32 256, 256
          %225 = vsyncadd %s219, %s224
          %s226 = smul.addr %s20, 2
          %s227 = smul.addr %s226, 128
          %s228 = scalar_lea.hbm %s3, %s227
          %s229 = sshll.u32 %s222, 4
          %s230 = int_to_ptr.vmem [resolvable:$true] %s229
          %235 = dma.hbm_to_vmem [thread:$0]  %s228, 256, %s230, %s219, 128, 128, 8
        $region32: #{tpu_custom_call.1} parent=19 // pred_fallthru
          _
      $region20: #{tpu_custom_call.1} parent=5 // pred_fallthru
        _
      %p236 = scmp.le.s32.totalorder 1, %s20
      %p237 = scmp.lt.s32.totalorder %s20, 3
      %p238 = pnand %p236, %p237
      %p239 = pneg %p238
      // Predicated region
      $region33: #{tpu_custom_call.1} parent=5 // pred_check
        _
      $region34: #{tpu_custom_call.1} parent=5 // pred_check_branch
        %241 = sbr.rel (%p238) target = $region36
      $region35: #{tpu_custom_call.1} parent=5 // pred_region
        %s242 = ssub.s32 %s20, 1
        // Predicated region
        $region37: #{tpu_custom_call.1} parent=35 // pred_check
          %p243 = pneg %p41
        $region38: #{tpu_custom_call.1} parent=35 // pred_check_branch
          %245 = sbr.rel (%p243) target = $region40
        $region39: #{tpu_custom_call.1} parent=35 // pred_region
          %246 = dma.done [#allocation5], 16
        $region40: #{tpu_custom_call.1} parent=35 // pred_fallthru
          _
        %s247 = sand.u32 %s54, 1
        %s248 = scalar_lea.sflag [#allocation3], %s247
        %s249 = sand.u32 %s54, 1
        %s250 = smul.addr %s249, 64
        %s251 = scalar_lea.vmem [#allocation6], %s250
        // Predicated region
        $region41: #{tpu_custom_call.1} parent=35 // pred_check
          %p252 = pneg %p67
        $region42: #{tpu_custom_call.1} parent=35 // pred_check_branch
          %254 = sbr.rel (%p252) target = $region44
        $region43: #{tpu_custom_call.1} parent=35 // pred_region
          %255 = dma.done %s248, 1024
        $region44: #{tpu_custom_call.1} parent=35 // pred_fallthru
          _
        %s256 = sand.u32 %s25, 1
        %s257 = scalar_lea.sflag [#allocation8], %s256
        %s258 = sand.u32 %s80, 1
        %s259 = smul.addr %s258, 16
        %s260 = scalar_lea.vmem [#allocation7], %s259
        // Predicated region
        $region45: #{tpu_custom_call.1} parent=35 // pred_check
          %p261 = pneg %p93
        $region46: #{tpu_custom_call.1} parent=35 // pred_check_branch
          %263 = sbr.rel (%p261) target = $region48
        $region47: #{tpu_custom_call.1} parent=35 // pred_region
          %264 = dma.done %s257, 256
        $region48: #{tpu_custom_call.1} parent=35 // pred_fallthru
          _
        %s265 = sand.u32 %s25, 1
        %s266 = scalar_lea.sflag [#allocation8], %s265
        %s267 = sand.u32 %s106, 1
        %s268 = smul.addr %s267, 16
        %s269 = scalar_lea.vmem [#allocation9], %s268
        // Predicated region
        $region49: #{tpu_custom_call.1} parent=35 // pred_check
          %p270 = pneg %p119
        $region50: #{tpu_custom_call.1} parent=35 // pred_check_branch
          %272 = sbr.rel (%p270) target = $region52
        $region51: #{tpu_custom_call.1} parent=35 // pred_region
          %273 = dma.done %s266, 256
        $region52: #{tpu_custom_call.1} parent=35 // pred_fallthru
          _
        %274 = sfence
        %p275 = pneg %p41
        %p276 = pneg %p38
        %s277 = sand.u32 %s54, 1
        %s278 = scalar_lea.sflag [#allocation3], %s277
        %s279 = sand.u32 %s54, 1
        %s280 = smul.addr %s279, 64
        %s281 = scalar_lea.vmem [#allocation6], %s280
        %p282 = pneg %p67
        %p283 = pneg %p64
        %s284 = sand.u32 %s25, 1
        %s285 = scalar_lea.sflag [#allocation8], %s284
        %s286 = sand.u32 %s80, 1
        %s287 = smul.addr %s286, 16
        %s288 = scalar_lea.vmem [#allocation7], %s287
        %p289 = pneg %p93
        %p290 = pneg %p90
        %s291 = sand.u32 %s25, 1
        %s292 = scalar_lea.sflag [#allocation8], %s291
        %s293 = sand.u32 %s106, 1
        %s294 = smul.addr %s293, 16
        %s295 = scalar_lea.vmem [#allocation9], %s294
        %p296 = pneg %p119
        %p297 = pneg %p116
        %p298 = pneg %p145
        %p299 = pneg %p142
        %s300 = sand.u32 %s132, 1
        %s301 = scalar_lea.sflag [#allocation4], %s300
        %s302 = sand.u32 %s132, 1
        %s303 = smul.addr %s302, 64
        %s304 = scalar_lea.vmem [#allocation10], %s303
        %s305 = sld [smem:[#allocation2 + %s25]]
        %p306 = scmp.ne.s32.totalorder %s305, 0
        // Predicated region
        $region53: #{tpu_custom_call.1} parent=35 // pred_check
          %p307 = pneg %p306
        $region54: #{tpu_custom_call.1} parent=35 // pred_check_branch
          %309 = sbr.rel (%p307) target = $region56
        $region55: #{tpu_custom_call.1} parent=35 // pred_region
          %v310 = vld [vmem:[%s251] sm:$0xff]
          %v311 = vld [vmem:[%s251 + $0x8] sm:$0xff]
          %v312 = vld [vmem:[%s251 + $0x10] sm:$0xff]
          %v313 = vld [vmem:[%s251 + $0x18] sm:$0xff]
          %v314 = vld [vmem:[%s251 + $0x20] sm:$0xff]
          %v315 = vld [vmem:[%s251 + $0x28] sm:$0xff]
          %v316 = vld [vmem:[%s251 + $0x30] sm:$0xff]
          %v317 = vld [vmem:[%s251 + $0x38] sm:$0xff]
          %v318 = vld [vmem:[%s269] sm:$0xff]
          %v319 = vld [vmem:[%s269 + $0x8] sm:$0xff]
          %v320 = vld [vmem:[%s260] sm:$0xff]
          %v321 = vld [vmem:[%s260 + $0x8] sm:$0xff]
          %vm322 = vcmask 130048
          %v324 = vsel %vm322, %v310, 0
          %v327 = vsel %vm322, %v311, 0
          %v330 = vsel %vm322, %v312, 0
          %v333 = vsel %vm322, %v313, 0
          %v336 = vsel %vm322, %v314, 0
          %v339 = vsel %vm322, %v315, 0
          %v342 = vsel %vm322, %v316, 0
          %v345 = vsel %vm322, %v317, 0
          %347 = vmatprep.subr.mxu0 0.0
          %348 = vmatpush1.msra.mxu0 0.0
          %349 = vmatprep.subr.mxu0 0.0
          %350 = vmatpush1.msra.mxu0 0.0
          %351 = vmatprep.subr.mxu0 0.0
          %352 = vmatpush1.msra.mxu0 0.0
          %353 = vmatprep.subr.mxu0 0.0
          %354 = vmatpush1.msra.mxu0 0.0
          %355 = vmatprep.subr.mxu0 0.0
          %356 = vmatpush1.msra.mxu0 0.0
          %357 = vmatprep.subr.mxu0 0.0
          %358 = vmatpush1.msra.mxu0 0.0
          %359 = vmatprep.subr.mxu0 0.0
          %360 = vmatpush1.msra.mxu0 0.0
          %361 = vmatprep.subr.mxu0 0.0
          %362 = vmatpush1.msra.mxu0 0.0
          %363 = vmatprep.subr.mxu0 0.0
          %364 = vmatpush1.msra.mxu0 0.0
          %365 = vmatprep.subr.mxu0 0.0
          %366 = vmatpush1.msra.mxu0 0.0
          %367 = vmatprep.subr.mxu0 0.0
          %368 = vmatpush1.msra.mxu0 0.0
          %369 = vmatprep.subr.mxu0 0.0
          %370 = vmatpush1.msra.mxu0 0.0
          %371 = vmatprep.subr.mxu0 0.0
          %372 = vmatpush1.msra.mxu0 0.0
          %373 = vmatprep.subr.mxu0 0.0
          %374 = vmatpush1.msra.mxu0 0.0
          %375 = vmatprep.subr.mxu0 0.0
          %376 = vmatpush1.msra.mxu0 %v319
          %377 = vmatprep.subr.mxu0 0.0
          %378 = vmatpush1.msra.mxu0 %v318
          %379 = vmatprep.subr.mxu0 0.0
          %380 = vmatpush2.msra.mxu0 0.0
          %381 = vmatprep.subr.mxu0 0.0
          %382 = vmatpush2.msra.mxu0 0.0
          %383 = vmatprep.subr.mxu0 0.0
          %384 = vmatpush2.msra.mxu0 0.0
          %385 = vmatprep.subr.mxu0 0.0
          %386 = vmatpush2.msra.mxu0 0.0
          %387 = vmatprep.subr.mxu0 0.0
          %388 = vmatpush2.msra.mxu0 0.0
          %389 = vmatprep.subr.mxu0 0.0
          %390 = vmatpush2.msra.mxu0 0.0
          %391 = vmatprep.subr.mxu0 0.0
          %392 = vmatpush2.msra.mxu0 0.0
          %393 = vmatprep.subr.mxu0 0.0
          %394 = vmatpush2.msra.mxu0 0.0
          %395 = vmatprep.subr.mxu0 0.0
          %396 = vmatpush2.msra.mxu0 0.0
          %397 = vmatprep.subr.mxu0 0.0
          %398 = vmatpush2.msra.mxu0 0.0
          %399 = vmatprep.subr.mxu0 0.0
          %400 = vmatpush2.msra.mxu0 0.0
          %401 = vmatprep.subr.mxu0 0.0
          %402 = vmatpush2.msra.mxu0 0.0
          %403 = vmatprep.subr.mxu0 0.0
          %404 = vmatpush2.msra.mxu0 0.0
          %405 = vmatprep.subr.mxu0 0.0
          %406 = vmatpush2.msra.mxu0 0.0
          %407 = vmatprep.subr.mxu0 0.0
          %408 = vmatpush2.msra.mxu0 0.0
          %409 = vmatprep.subr.mxu0 0.0
          %410 = vmatpush2.msra.mxu0 0.0
          %411 = vmatprep.mubr.f32.mxu0 0.0
          %412 = vmatmul.mubr.f32.gmra.mxu0 %v324
          %v413 = vpop.f32.mrf.mxu0
          %v414 = vadd.f32 0.0, %v413
          %v415 = vpop.f32.mrf.mxu0
          %416 = vmatprep.mubr.f32.mxu0 0.0
          %417 = vmatmul.mubr.f32.gmra.mxu0 %v327
          %v418 = vpop.f32.mrf.mxu0
          %v419 = vadd.f32 0.0, %v418
          %v420 = vpop.f32.mrf.mxu0
          %421 = vmatprep.mubr.f32.mxu0 0.0
          %422 = vmatmul.mubr.f32.gmra.mxu0 %v330
          %v423 = vpop.f32.mrf.mxu0
          %v424 = vadd.f32 0.0, %v423
          %v425 = vpop.f32.mrf.mxu0
          %426 = vmatprep.mubr.f32.mxu0 0.0
          %427 = vmatmul.mubr.f32.gmra.mxu0 %v333
          %v428 = vpop.f32.mrf.mxu0
          %v429 = vadd.f32 0.0, %v428
          %v430 = vpop.f32.mrf.mxu0
          %431 = vmatprep.mubr.f32.mxu0 0.0
          %432 = vmatmul.mubr.f32.gmra.mxu0 %v336
          %v433 = vpop.f32.mrf.mxu0
          %v434 = vadd.f32 0.0, %v433
          %v435 = vpop.f32.mrf.mxu0
          %436 = vmatprep.mubr.f32.mxu0 0.0
          %437 = vmatmul.mubr.f32.gmra.mxu0 %v339
          %v438 = vpop.f32.mrf.mxu0
          %v439 = vadd.f32 0.0, %v438
          %v440 = vpop.f32.mrf.mxu0
          %441 = vmatprep.mubr.f32.mxu0 0.0
          %442 = vmatmul.mubr.f32.gmra.mxu0 %v342
          %v443 = vpop.f32.mrf.mxu0
          %v444 = vadd.f32 0.0, %v443
          %v445 = vpop.f32.mrf.mxu0
          %446 = vmatprep.mubr.f32.mxu0 0.0
          %447 = vmatmul.mubr.f32.gmra.mxu0 %v345
          %v448 = vpop.f32.mrf.mxu0
          %v449 = vadd.f32 0.0, %v448
          %v450 = vpop.f32.mrf.mxu0
          %451 = vdwg.mxu0
          %v453 = vsel %vm322, %v320, 0
          %v456 = vsel %vm322, %v321, 0
          %458 = vmatprep.subr.mxu0 0.0
          %459 = vmatpush1.msra.mxu0 0.0
          %460 = vmatprep.subr.mxu0 0.0
          %461 = vmatpush1.msra.mxu0 0.0
          %462 = vmatprep.subr.mxu0 0.0
          %463 = vmatpush1.msra.mxu0 0.0
          %464 = vmatprep.subr.mxu0 0.0
          %465 = vmatpush1.msra.mxu0 0.0
          %466 = vmatprep.subr.mxu0 0.0
          %467 = vmatpush1.msra.mxu0 0.0
          %468 = vmatprep.subr.mxu0 0.0
          %469 = vmatpush1.msra.mxu0 0.0
          %470 = vmatprep.subr.mxu0 0.0
          %471 = vmatpush1.msra.mxu0 0.0
          %472 = vmatprep.subr.mxu0 0.0
          %473 = vmatpush1.msra.mxu0 0.0
          %474 = vmatprep.subr.mxu0 0.0
          %475 = vmatpush1.msra.mxu0 0.0
          %476 = vmatprep.subr.mxu0 0.0
          %477 = vmatpush1.msra.mxu0 0.0
          %478 = vmatprep.subr.mxu0 0.0
          %479 = vmatpush1.msra.mxu0 0.0
          %480 = vmatprep.subr.mxu0 0.0
          %481 = vmatpush1.msra.mxu0 0.0
          %482 = vmatprep.subr.mxu0 0.0
          %483 = vmatpush1.msra.mxu0 0.0
          %484 = vmatprep.subr.mxu0 0.0
          %485 = vmatpush1.msra.mxu0 0.0
          %486 = vmatprep.subr.mxu0 0.0
          %487 = vmatpush1.msra.mxu0 %v419
          %488 = vmatprep.subr.mxu0 0.0
          %489 = vmatpush1.msra.mxu0 %v414
          %490 = vmatprep.subr.mxu0 0.0
          %491 = vmatpush2.msra.mxu0 0.0
          %492 = vmatprep.subr.mxu0 0.0
          %493 = vmatpush2.msra.mxu0 0.0
          %494 = vmatprep.subr.mxu0 0.0
          %495 = vmatpush2.msra.mxu0 0.0
          %496 = vmatprep.subr.mxu0 0.0
          %497 = vmatpush2.msra.mxu0 0.0
          %498 = vmatprep.subr.mxu0 0.0
          %499 = vmatpush2.msra.mxu0 0.0
          %500 = vmatprep.subr.mxu0 0.0
          %501 = vmatpush2.msra.mxu0 0.0
          %502 = vmatprep.subr.mxu0 0.0
          %503 = vmatpush2.msra.mxu0 0.0
          %504 = vmatprep.subr.mxu0 0.0
          %505 = vmatpush2.msra.mxu0 0.0
          %506 = vmatprep.subr.mxu0 0.0
          %507 = vmatpush2.msra.mxu0 0.0
          %508 = vmatprep.subr.mxu0 0.0
          %509 = vmatpush2.msra.mxu0 0.0
          %510 = vmatprep.subr.mxu0 0.0
          %511 = vmatpush2.msra.mxu0 0.0
          %512 = vmatprep.subr.mxu0 0.0
          %513 = vmatpush2.msra.mxu0 0.0
          %514 = vmatprep.subr.mxu0 0.0
          %515 = vmatpush2.msra.mxu0 0.0
          %516 = vmatprep.subr.mxu0 0.0
          %517 = vmatpush2.msra.mxu0 0.0
          %518 = vmatprep.subr.mxu0 0.0
          %519 = vmatpush2.msra.mxu0 0.0
          %520 = vmatprep.subr.mxu0 0.0
          %521 = vmatpush2.msra.mxu0 0.0
          %522 = vmatprep.mubr.f32.mxu0 0.0
          %523 = vmatmul.mubr.f32.gmra.mxu0 %v453
          %v524 = vpop.f32.mrf.mxu0
          %v525 = vadd.f32 0.0, %v524
          %v526 = vpop.f32.mrf.mxu0
          %527 = vmatprep.mubr.f32.mxu0 0.0
          %528 = vmatmul.mubr.f32.gmra.mxu0 %v456
          %v529 = vpop.f32.mrf.mxu0
          %v530 = vadd.f32 0.0, %v529
          %v531 = vpop.f32.mrf.mxu0
          %532 = vdwg.mxu0
          %533 = vst.msk [vmem:[%s304] sm:$0xff] %vm322, %v525
          %534 = vst.msk [vmem:[%s304 + $0x8] sm:$0xff] %vm322, %v530
          %535 = vmatprep.subr.mxu0 0.0
          %536 = vmatpush1.msra.mxu0 0.0
          %537 = vmatprep.subr.mxu0 0.0
          %538 = vmatpush1.msra.mxu0 0.0
          %539 = vmatprep.subr.mxu0 0.0
          %540 = vmatpush1.msra.mxu0 0.0
          %541 = vmatprep.subr.mxu0 0.0
          %542 = vmatpush1.msra.mxu0 0.0
          %543 = vmatprep.subr.mxu0 0.0
          %544 = vmatpush1.msra.mxu0 0.0
          %545 = vmatprep.subr.mxu0 0.0
          %546 = vmatpush1.msra.mxu0 0.0
          %547 = vmatprep.subr.mxu0 0.0
          %548 = vmatpush1.msra.mxu0 0.0
          %549 = vmatprep.subr.mxu0 0.0
          %550 = vmatpush1.msra.mxu0 0.0
          %551 = vmatprep.subr.mxu0 0.0
          %552 = vmatpush1.msra.mxu0 0.0
          %553 = vmatprep.subr.mxu0 0.0
          %554 = vmatpush1.msra.mxu0 0.0
          %555 = vmatprep.subr.mxu0 0.0
          %556 = vmatpush1.msra.mxu0 0.0
          %557 = vmatprep.subr.mxu0 0.0
          %558 = vmatpush1.msra.mxu0 0.0
          %559 = vmatprep.subr.mxu0 0.0
          %560 = vmatpush1.msra.mxu0 0.0
          %561 = vmatprep.subr.mxu0 0.0
          %562 = vmatpush1.msra.mxu0 0.0
          %563 = vmatprep.subr.mxu0 0.0
          %564 = vmatpush1.msra.mxu0 %v429
          %565 = vmatprep.subr.mxu0 0.0
          %566 = vmatpush1.msra.mxu0 %v424
          %567 = vmatprep.subr.mxu0 0.0
          %568 = vmatpush2.msra.mxu0 0.0
          %569 = vmatprep.subr.mxu0 0.0
          %570 = vmatpush2.msra.mxu0 0.0
          %571 = vmatprep.subr.mxu0 0.0
          %572 = vmatpush2.msra.mxu0 0.0
          %573 = vmatprep.subr.mxu0 0.0
          %574 = vmatpush2.msra.mxu0 0.0
          %575 = vmatprep.subr.mxu0 0.0
          %576 = vmatpush2.msra.mxu0 0.0
          %577 = vmatprep.subr.mxu0 0.0
          %578 = vmatpush2.msra.mxu0 0.0
          %579 = vmatprep.subr.mxu0 0.0
          %580 = vmatpush2.msra.mxu0 0.0
          %581 = vmatprep.subr.mxu0 0.0
          %582 = vmatpush2.msra.mxu0 0.0
          %583 = vmatprep.subr.mxu0 0.0
          %584 = vmatpush2.msra.mxu0 0.0
          %585 = vmatprep.subr.mxu0 0.0
          %586 = vmatpush2.msra.mxu0 0.0
          %587 = vmatprep.subr.mxu0 0.0
          %588 = vmatpush2.msra.mxu0 0.0
          %589 = vmatprep.subr.mxu0 0.0
          %590 = vmatpush2.msra.mxu0 0.0
          %591 = vmatprep.subr.mxu0 0.0
          %592 = vmatpush2.msra.mxu0 0.0
          %593 = vmatprep.subr.mxu0 0.0
          %594 = vmatpush2.msra.mxu0 0.0
          %595 = vmatprep.subr.mxu0 0.0
          %596 = vmatpush2.msra.mxu0 0.0
          %597 = vmatprep.subr.mxu0 0.0
          %598 = vmatpush2.msra.mxu0 0.0
          %599 = vmatprep.mubr.f32.mxu0 0.0
          %600 = vmatmul.mubr.f32.gmra.mxu0 %v453
          %v601 = vpop.f32.mrf.mxu0
          %v602 = vadd.f32 0.0, %v601
          %v603 = vpop.f32.mrf.mxu0
          %604 = vmatprep.mubr.f32.mxu0 0.0
          %605 = vmatmul.mubr.f32.gmra.mxu0 %v456
          %v606 = vpop.f32.mrf.mxu0
          %v607 = vadd.f32 0.0, %v606
          %v608 = vpop.f32.mrf.mxu0
          %609 = vdwg.mxu0
          %s610 = scalar_lea.vmem %s304, 16 [#allocation10]
          %611 = vst.msk [vmem:[%s610] sm:$0xff] %vm322, %v602
          %612 = vst.msk [vmem:[%s610 + $0x8] sm:$0xff] %vm322, %v607
          %613 = vmatprep.subr.mxu0 0.0
          %614 = vmatpush1.msra.mxu0 0.0
          %615 = vmatprep.subr.mxu0 0.0
          %616 = vmatpush1.msra.mxu0 0.0
          %617 = vmatprep.subr.mxu0 0.0
          %618 = vmatpush1.msra.mxu0 0.0
          %619 = vmatprep.subr.mxu0 0.0
          %620 = vmatpush1.msra.mxu0 0.0
          %621 = vmatprep.subr.mxu0 0.0
          %622 = vmatpush1.msra.mxu0 0.0
          %623 = vmatprep.subr.mxu0 0.0
          %624 = vmatpush1.msra.mxu0 0.0
          %625 = vmatprep.subr.mxu0 0.0
          %626 = vmatpush1.msra.mxu0 0.0
          %627 = vmatprep.subr.mxu0 0.0
          %628 = vmatpush1.msra.mxu0 0.0
          %629 = vmatprep.subr.mxu0 0.0
          %630 = vmatpush1.msra.mxu0 0.0
          %631 = vmatprep.subr.mxu0 0.0
          %632 = vmatpush1.msra.mxu0 0.0
          %633 = vmatprep.subr.mxu0 0.0
          %634 = vmatpush1.msra.mxu0 0.0
          %635 = vmatprep.subr.mxu0 0.0
          %636 = vmatpush1.msra.mxu0 0.0
          %637 = vmatprep.subr.mxu0 0.0
          %638 = vmatpush1.msra.mxu0 0.0
          %639 = vmatprep.subr.mxu0 0.0
          %640 = vmatpush1.msra.mxu0 0.0
          %641 = vmatprep.subr.mxu0 0.0
          %642 = vmatpush1.msra.mxu0 %v439
          %643 = vmatprep.subr.mxu0 0.0
          %644 = vmatpush1.msra.mxu0 %v434
          %645 = vmatprep.subr.mxu0 0.0
          %646 = vmatpush2.msra.mxu0 0.0
          %647 = vmatprep.subr.mxu0 0.0
          %648 = vmatpush2.msra.mxu0 0.0
          %649 = vmatprep.subr.mxu0 0.0
          %650 = vmatpush2.msra.mxu0 0.0
          %651 = vmatprep.subr.mxu0 0.0
          %652 = vmatpush2.msra.mxu0 0.0
          %653 = vmatprep.subr.mxu0 0.0
          %654 = vmatpush2.msra.mxu0 0.0
          %655 = vmatprep.subr.mxu0 0.0
          %656 = vmatpush2.msra.mxu0 0.0
          %657 = vmatprep.subr.mxu0 0.0
          %658 = vmatpush2.msra.mxu0 0.0
          %659 = vmatprep.subr.mxu0 0.0
          %660 = vmatpush2.msra.mxu0 0.0
          %661 = vmatprep.subr.mxu0 0.0
          %662 = vmatpush2.msra.mxu0 0.0
          %663 = vmatprep.subr.mxu0 0.0
          %664 = vmatpush2.msra.mxu0 0.0
          %665 = vmatprep.subr.mxu0 0.0
          %666 = vmatpush2.msra.mxu0 0.0
          %667 = vmatprep.subr.mxu0 0.0
          %668 = vmatpush2.msra.mxu0 0.0
          %669 = vmatprep.subr.mxu0 0.0
          %670 = vmatpush2.msra.mxu0 0.0
          %671 = vmatprep.subr.mxu0 0.0
          %672 = vmatpush2.msra.mxu0 0.0
          %673 = vmatprep.subr.mxu0 0.0
          %674 = vmatpush2.msra.mxu0 0.0
          %675 = vmatprep.subr.mxu0 0.0
          %676 = vmatpush2.msra.mxu0 0.0
          %677 = vmatprep.mubr.f32.mxu0 0.0
          %678 = vmatmul.mubr.f32.gmra.mxu0 %v453
          %v679 = vpop.f32.mrf.mxu0
          %v680 = vadd.f32 0.0, %v679
          %v681 = vpop.f32.mrf.mxu0
          %682 = vmatprep.mubr.f32.mxu0 0.0
          %683 = vmatmul.mubr.f32.gmra.mxu0 %v456
          %v684 = vpop.f32.mrf.mxu0
          %v685 = vadd.f32 0.0, %v684
          %v686 = vpop.f32.mrf.mxu0
          %687 = vdwg.mxu0
          %s688 = scalar_lea.vmem %s304, 32 [#allocation10]
          %689 = vst.msk [vmem:[%s688] sm:$0xff] %vm322, %v680
          %690 = vst.msk [vmem:[%s688 + $0x8] sm:$0xff] %vm322, %v685
          %691 = vmatprep.subr.mxu0 0.0
          %692 = vmatpush1.msra.mxu0 0.0
          %693 = vmatprep.subr.mxu0 0.0
          %694 = vmatpush1.msra.mxu0 0.0
          %695 = vmatprep.subr.mxu0 0.0
          %696 = vmatpush1.msra.mxu0 0.0
          %697 = vmatprep.subr.mxu0 0.0
          %698 = vmatpush1.msra.mxu0 0.0
          %699 = vmatprep.subr.mxu0 0.0
          %700 = vmatpush1.msra.mxu0 0.0
          %701 = vmatprep.subr.mxu0 0.0
          %702 = vmatpush1.msra.mxu0 0.0
          %703 = vmatprep.subr.mxu0 0.0
          %704 = vmatpush1.msra.mxu0 0.0
          %705 = vmatprep.subr.mxu0 0.0
          %706 = vmatpush1.msra.mxu0 0.0
          %707 = vmatprep.subr.mxu0 0.0
          %708 = vmatpush1.msra.mxu0 0.0
          %709 = vmatprep.subr.mxu0 0.0
          %710 = vmatpush1.msra.mxu0 0.0
          %711 = vmatprep.subr.mxu0 0.0
          %712 = vmatpush1.msra.mxu0 0.0
          %713 = vmatprep.subr.mxu0 0.0
          %714 = vmatpush1.msra.mxu0 0.0
          %715 = vmatprep.subr.mxu0 0.0
          %716 = vmatpush1.msra.mxu0 0.0
          %717 = vmatprep.subr.mxu0 0.0
          %718 = vmatpush1.msra.mxu0 0.0
          %719 = vmatprep.subr.mxu0 0.0
          %720 = vmatpush1.msra.mxu0 %v449
          %721 = vmatprep.subr.mxu0 0.0
          %722 = vmatpush1.msra.mxu0 %v444
          %723 = vmatprep.subr.mxu0 0.0
          %724 = vmatpush2.msra.mxu0 0.0
          %725 = vmatprep.subr.mxu0 0.0
          %726 = vmatpush2.msra.mxu0 0.0
          %727 = vmatprep.subr.mxu0 0.0
          %728 = vmatpush2.msra.mxu0 0.0
          %729 = vmatprep.subr.mxu0 0.0
          %730 = vmatpush2.msra.mxu0 0.0
          %731 = vmatprep.subr.mxu0 0.0
          %732 = vmatpush2.msra.mxu0 0.0
          %733 = vmatprep.subr.mxu0 0.0
          %734 = vmatpush2.msra.mxu0 0.0
          %735 = vmatprep.subr.mxu0 0.0
          %736 = vmatpush2.msra.mxu0 0.0
          %737 = vmatprep.subr.mxu0 0.0
          %738 = vmatpush2.msra.mxu0 0.0
          %739 = vmatprep.subr.mxu0 0.0
          %740 = vmatpush2.msra.mxu0 0.0
          %741 = vmatprep.subr.mxu0 0.0
          %742 = vmatpush2.msra.mxu0 0.0
          %743 = vmatprep.subr.mxu0 0.0
          %744 = vmatpush2.msra.mxu0 0.0
          %745 = vmatprep.subr.mxu0 0.0
          %746 = vmatpush2.msra.mxu0 0.0
          %747 = vmatprep.subr.mxu0 0.0
          %748 = vmatpush2.msra.mxu0 0.0
          %749 = vmatprep.subr.mxu0 0.0
          %750 = vmatpush2.msra.mxu0 0.0
          %751 = vmatprep.subr.mxu0 0.0
          %752 = vmatpush2.msra.mxu0 0.0
          %753 = vmatprep.subr.mxu0 0.0
          %754 = vmatpush2.msra.mxu0 0.0
          %755 = vmatprep.mubr.f32.mxu0 0.0
          %756 = vmatmul.mubr.f32.gmra.mxu0 %v453
          %v757 = vpop.f32.mrf.mxu0
          %v758 = vadd.f32 0.0, %v757
          %v759 = vpop.f32.mrf.mxu0
          %760 = vmatprep.mubr.f32.mxu0 0.0
          %761 = vmatmul.mubr.f32.gmra.mxu0 %v456
          %v762 = vpop.f32.mrf.mxu0
          %v763 = vadd.f32 0.0, %v762
          %v764 = vpop.f32.mrf.mxu0
          %765 = vdwg.mxu0
          %s766 = scalar_lea.vmem %s304, 48 [#allocation10]
          %767 = vst.msk [vmem:[%s766] sm:$0xff] %vm322, %v758
          %768 = vst.msk [vmem:[%s766 + $0x8] sm:$0xff] %vm322, %v763
        $region56: #{tpu_custom_call.1} parent=35 // pred_fallthru
          _
        %p769 = scmp.eq.s32.totalorder %s305, 0
        // Predicated region
        $region57: #{tpu_custom_call.1} parent=35 // pred_check
          %p770 = pneg %p769
        $region58: #{tpu_custom_call.1} parent=35 // pred_check_branch
          %772 = sbr.rel (%p770) target = $region60
        $region59: #{tpu_custom_call.1} parent=35 // pred_region
          %v773 = vld [vmem:[%s251] sm:$0xff]
          %v774 = vld [vmem:[%s251 + $0x8] sm:$0xff]
          %v775 = vld [vmem:[%s251 + $0x10] sm:$0xff]
          %v776 = vld [vmem:[%s251 + $0x18] sm:$0xff]
          %v777 = vld [vmem:[%s251 + $0x20] sm:$0xff]
          %v778 = vld [vmem:[%s251 + $0x28] sm:$0xff]
          %v779 = vld [vmem:[%s251 + $0x30] sm:$0xff]
          %v780 = vld [vmem:[%s251 + $0x38] sm:$0xff]
          %vm781 = vcmask 130048
          %782 = vst.msk [vmem:[%s304] sm:$0xff] %vm781, %v773
          %783 = vst.msk [vmem:[%s304 + $0x8] sm:$0xff] %vm781, %v774
          %784 = vst.msk [vmem:[%s304 + $0x10] sm:$0xff] %vm781, %v775
          %785 = vst.msk [vmem:[%s304 + $0x18] sm:$0xff] %vm781, %v776
          %786 = vst.msk [vmem:[%s304 + $0x20] sm:$0xff] %vm781, %v777
          %787 = vst.msk [vmem:[%s304 + $0x28] sm:$0xff] %vm781, %v778
          %788 = vst.msk [vmem:[%s304 + $0x30] sm:$0xff] %vm781, %v779
          %789 = vst.msk [vmem:[%s304 + $0x38] sm:$0xff] %vm781, %v780
        $region60: #{tpu_custom_call.1} parent=35 // pred_fallthru
          _
        %s790 = sand.u32 %s132, 1
        %s791 = scalar_lea.sflag [#allocation4], %s790
        %s792 = sand.u32 %s132, 1
        %s793 = smul.addr %s792, 64
        %s794 = scalar_lea.vmem [#allocation10], %s793
        // Predicated region
        $region61: #{tpu_custom_call.1} parent=35 // pred_check
          %p795 = pneg %p142
        $region62: #{tpu_custom_call.1} parent=35 // pred_check_branch
          %797 = sbr.rel (%p795) target = $region64
        $region63: #{tpu_custom_call.1} parent=35 // pred_region
          %s799 = ssub.s32 1024, 1024
          %800 = vsyncadd %s791, %s799
          %s801 = smul.addr %s25, 8
          %s802 = smul.addr %s801, 128
          %s803 = scalar_lea.hbm %s4, %s802
          %s804 = sshll.u32 %s794, 4
          %s805 = int_to_ptr.vmem [resolvable:$true] %s804
          %810 = dma.vmem_to_hbm [thread:$0]  %s805, 1024, %s803, %s791, 128, 128, 8
        $region64: #{tpu_custom_call.1} parent=35 // pred_fallthru
          _
      $region36: #{tpu_custom_call.1} parent=5 // pred_fallthru
        _
      %p811 = scmp.le.s32.totalorder 2, %s20
      // Predicated region
      $region65: #{tpu_custom_call.1} parent=5 // pred_check
        %p812 = pneg %p811
      $region66: #{tpu_custom_call.1} parent=5 // pred_check_branch
        %814 = sbr.rel (%p812) target = $region68
      $region67: #{tpu_custom_call.1} parent=5 // pred_region
        %s815 = ssub.s32 %s20, 2
        // Predicated region
        $region69: #{tpu_custom_call.1} parent=67 // pred_check
          %p816 = pneg %p148
        $region70: #{tpu_custom_call.1} parent=67 // pred_check_branch
          %818 = sbr.rel (%p816) target = $region72
        $region71: #{tpu_custom_call.1} parent=67 // pred_region
          %s819 = sand.u32 %s133, 1
          %s820 = scalar_lea.sflag [#allocation4], %s819
          %s821 = sand.u32 %s133, 1
          %s822 = smul.addr %s821, 64
          %s823 = scalar_lea.vmem [#allocation10], %s822
          %824 = dma.done %s820, 1024
        $region72: #{tpu_custom_call.1} parent=67 // pred_fallthru
          _
      $region68: #{tpu_custom_call.1} parent=5 // pred_fallthru
        _
    $region6: #{tpu_custom_call.1} parent=1 // loop_footer
      %s24 = sadd.s32 1, %s20
    $region7: #{tpu_custom_call.1} parent=1 // loop_footer_branch
      %19 = sbr.rel target = $region3
    $region8: #{tpu_custom_call.1} parent=1 // loop_exit
      _
    %825 = vsyncpa [#allocation3], 1
    %s826 = scalar_lea.sflag [#allocation3], 1
    %827 = vsyncpa %s826, 1
    %828 = vsyncpa [#allocation8], 1
    %s829 = scalar_lea.sflag [#allocation8], 1
    %830 = vsyncpa %s829, 1
    %831 = vsyncpa [#allocation4], 1
    %s832 = scalar_lea.sflag [#allocation4], 1
    %833 = vsyncpa %s832, 1
    %834 = vsyncpa [#allocation5], 1
    %s835 = scalar_lea.sflag [#allocation5], 1
    %836 = vsyncpa %s835, 1

</llo_original>
